<compile_context>
chip_gen: v7x
topology: tpu7x:2x2x1
jax: 0.10.0
libtpu: 0.0.40
codegen_flags: <defaults>
</compile_context>

<pallas_src>
import jax
import jax.numpy as jnp
from jax.experimental import pallas as pl
from jax.experimental.pallas import tpu as pltpu

_LANE_CANDIDATES = (2048, 1024, 512, 256, 128)   # lane-dense widths (mult. of 128)
_TARGET_BLOCK_BYTES = 2 * 1024 * 1024            # ~2 MiB tiles (per perf review)
_ROW_MULT = 32                                   # legal sublane multiple for f32/bf16/int8
_MIN_PALLAS_ELEMS = 1 << 16                      # below this, fused XLA wins


# --------------------------------------------------------------------------- #
# Kernel
# --------------------------------------------------------------------------- #
def _expf_kernel(clamp_ref, s_ref, o_ref):
    # clamp_ref: (1,) f32 scalar-prefetch ref in SMEM
    # s_ref / o_ref: (block_r, lane_w) tiles in VMEM, native activation dtype
    # identity: sigmoid(x) - 0.5 == 0.5 * tanh(x / 2)
    x = s_ref[...].astype(jnp.float32)
    c_half = clamp_ref[0] * 0.5
    o_ref[...] = jnp.exp(c_half * jnp.tanh(x * 0.5)).astype(o_ref.dtype)


# --------------------------------------------------------------------------- #
# Shape / tiling helpers (all static, resolved at trace time)
# --------------------------------------------------------------------------- #
def _pick_lane_width(total: int):
    """Largest lane-dense width (multiple of 128) that divides `total`."""
    for lw in _LANE_CANDIDATES:
        if total % lw == 0:
            return lw
    return None


def _pick_block_rows(rows: int, lane_w: int, itemsize: int) -> int:
    """Block row count: ~2 MiB tiles, >=2 grid steps when possible, 32-aligned."""
    if rows <= 2 * _ROW_MULT:
        return rows                      # single block == full dim -> always legal
    by_bytes = _TARGET_BLOCK_BYTES // (lane_w * itemsize)
    by_split = rows // 2                 # guarantee >= 2 grid steps (v7x: 2 TCs)
    br = min(by_bytes, by_split)
    br = (br // _ROW_MULT) * _ROW_MULT
    return max(_ROW_MULT, min(br, rows))


# --------------------------------------------------------------------------- #
# Pallas path (zero-copy reshape in/out; jitted so reshapes are pure bitcasts)
# --------------------------------------------------------------------------- #
@jax.jit
def _expf_pallas(s: jax.Array, clamp: jax.Array) -> jax.Array:
    total = s.size
    lane_w = _pick_lane_width(total)
    assert lane_w is not None, "dispatcher must guarantee a 128-aligned factorization"
    rows = total // lane_w
    itemsize = jnp.dtype(s.dtype).itemsize
    block_r = _pick_block_rows(rows, lane_w, itemsize)
    n_blocks = pl.cdiv(rows, block_r)    # ragged last block is masked by Pallas

    s2d = s.reshape(rows, lane_w)        # row-major flatten: layout bitcast, no copy
    clamp_f32 = clamp.astype(jnp.float32).reshape(1)

    cost = pl.CostEstimate(
        flops=4 * total,
        transcendentals=2 * total,
        bytes_accessed=2 * total * itemsize,   # 1 read + 1 write, native dtype
    )

    out2d = pl.pallas_call(
        _expf_kernel,
        out_shape=jax.ShapeDtypeStruct((rows, lane_w), s.dtype),
        grid_spec=pltpu.PrefetchScalarGridSpec(
            num_scalar_prefetch=1,                             # clamp -> SMEM
            grid=(n_blocks,),
            in_specs=[
                pl.BlockSpec((block_r, lane_w), lambda i, clamp_ref: (i, 0)),
            ],
            out_specs=pl.BlockSpec((block_r, lane_w), lambda i, clamp_ref: (i, 0)),
        ),
        compiler_params=pltpu.CompilerParams(
            dimension_semantics=("parallel",),                 # megacore-shardable on v7x
        ),
        cost_estimate=cost,
    )(clamp_f32, s2d)

    return out2d.reshape(s.shape)


# --------------------------------------------------------------------------- #
# Fused-XLA fallback (tiny tensors / non-128-aligned element counts)
# --------------------------------------------------------------------------- #
@jax.jit
def _expf_jnp(s: jax.Array, clamp: jax.Array) -> jax.Array:
    c = clamp.astype(jnp.float32).reshape(())
    x = s.astype(jnp.float32)
    # same tanh form as the kernel for numerical consistency
    return jnp.exp((0.5 * c) * jnp.tanh(0.5 * x)).astype(s.dtype)


# --------------------------------------------------------------------------- #
# Public forward
# --------------------------------------------------------------------------- #
def expf_forward(s: jax.Array, clamp: jax.Array, *,
                 min_pallas_size: int = _MIN_PALLAS_ELEMS) -> jax.Array:
    """expF.forward.  s: activation (any shape, e.g. NCHW); clamp: (1,) scalar."""
    total = s.size
    if total < min_pallas_size or _pick_lane_width(total) is None:
        # Tiny tensors: fixed pallas_call launch cost dwarfs the streaming work.
        # Non-128-aligned totals: any pad/slice/concat around the custom call
        # costs an extra HBM round trip, which is worse than fused XLA math.
        return _expf_jnp(s, clamp)
    return _expf_pallas(s, clamp)


def expf_reference(s: jax.Array, clamp: jax.Array) -> jax.Array:
    return jnp.exp(clamp[0] * (jax.nn.sigmoid(s) - 0.5))


# --------------------------------------------------------------------------- #
# Test
# --------------------------------------------------------------------------- #
if __name__ == "__main__":
    key = jax.random.PRNGKey(0)
    k_s, k_c = jax.random.split(key)

    # small NCHW input consistent with a conv-style block
    x = jax.random.normal(k_s, (2, 4, 16, 16), dtype=jnp.float32)
    # clamp ~ torch.randn(1), deterministic
    clamp = jax.random.normal(k_c, (1,), dtype=jnp.float32)

    # --- Pallas path (forced, since the test tensor is below the dispatch
    #     threshold where fused XLA would normally be used) ------------------
    out = expf_forward(x, clamp, min_pallas_size=0)
    out = jax.block_until_ready(out)
    ref = expf_reference(x, clamp)
    assert out.shape == x.shape and out.dtype == x.dtype
    assert jnp.allclose(out, ref, rtol=1e-5, atol=1e-6), "f32 mismatch vs reference"

    # --- Pallas path with native bf16 streaming -----------------------------
    xb = x.astype(jnp.bfloat16)
    outb = jax.block_until_ready(expf_forward(xb, clamp, min_pallas_size=0))
    refb = expf_reference(xb.astype(jnp.float32), clamp)
    assert outb.dtype == jnp.bfloat16
    assert jnp.allclose(outb.astype(jnp.float32), refb, rtol=2e-2, atol=2e-2), \
        "bf16 mismatch vs reference"

    # --- Default dispatch (small tensor -> fused XLA fallback) --------------
    out_small = jax.block_until_ready(expf_forward(x, clamp))
    assert jnp.allclose(out_small, ref, rtol=1e-5, atol=1e-6), "fallback mismatch"

    print("KERNEL_OK")
</pallas_src>

<mosaic_0001>
module attributes {stable_mosaic.version = 11 : i64} {
  func.func @_expf_kernel(%arg0: i32, %arg1: memref<1xf32, #tpu.memory_space<smem>>, %arg2: memref<1x2048xf32, #tpu.memory_space<vmem>>, %arg3: memref<1x2048xf32, #tpu.memory_space<vmem>>) attributes {dimension_semantics = [#tpu.dimension_semantics<parallel>], iteration_bounds = array<i64: 1>, scalar_prefetch = 1 : i64, scratch_operands = 0 : i64, tpu.core_type = #tpu.core_type<tc>, window_params = [{transform_indices = @transform_0, window_bounds = array<i64: 1, 2048>}, {transform_indices = @transform_1, window_bounds = array<i64: 1, 2048>}]} {
    %c0 = arith.constant 0 : index
    %c0_0 = arith.constant 0 : index
    %0 = vector.load %arg2[%c0, %c0_0] : memref<1x2048xf32, #tpu.memory_space<vmem>>, vector<1x2048xf32>
    %c0_1 = arith.constant 0 : index
    %1 = memref.load %arg1[%c0_1] : memref<1xf32, #tpu.memory_space<smem>>
    %cst = arith.constant 5.000000e-01 : f32
    %2 = arith.mulf %1, %cst : f32
    %cst_2 = arith.constant 5.000000e-01 : f32
    %3 = vector.broadcast %cst_2 : f32 to vector<1x2048xf32>
    %4 = arith.mulf %0, %3 : vector<1x2048xf32>
    %5 = math.tanh %4 : vector<1x2048xf32>
    %6 = vector.broadcast %2 : f32 to vector<1x2048xf32>
    %7 = arith.mulf %6, %5 : vector<1x2048xf32>
    %8 = math.exp %7 : vector<1x2048xf32>
    %c0_3 = arith.constant 0 : index
    %c0_4 = arith.constant 0 : index
    %9 = vector.load %arg3[%c0_3, %c0_4] : memref<1x2048xf32, #tpu.memory_space<vmem>>, vector<1x2048xf32>
    tpu.vector_store %arg3[%c0_3, %c0_4], %8 {strides = array<i32>} : memref<1x2048xf32, #tpu.memory_space<vmem>>, vector<1x2048xf32>,
    return
  }
  func.func @transform_0(%arg0: i32, %arg1: memref<1xf32, #tpu.memory_space<smem>>) -> (i32, i32) {
    %c0_i32 = arith.constant 0 : i32
    %c0_i32_0 = arith.constant 0 : i32
    return %arg0, %c0_i32 : i32, i32
  }
  func.func @transform_1(%arg0: i32, %arg1: memref<1xf32, #tpu.memory_space<smem>>) -> (i32, i32) {
    %c0_i32 = arith.constant 0 : i32
    %c0_i32_0 = arith.constant 0 : i32
    return %arg0, %c0_i32 : i32, i32
  }
}

</mosaic_0001>

<llo_original>
// kernel: _expf_pallas.1
$region0: #{_expf_pallas.1}
  #allocation0 [shape = 'u32[]', space=smem, size = 0x4, offset = 0x4, fixed_abs, tag = 'smem constant byte address 0x4 - core index']
  #allocation1 [shape = 'u32[144,128]{1,0:T(1,128)}', space=vmem, size = 0x12000, scoped, tag = 'internal scratch']
  #allocation2 [shape = 's32[1]{0}', space=sflag, size = 0x4, scoped, tag = 'scoped memory for _expf_pallas.1']
  #allocation3 [shape = 'f32[1]{0:T(128)S(6)}', space=smem, size = 0x200, scoped, tag = 'prefetched SMEM operand 0']
  %s0 = inlined_call_operand.<no memory space> [shape: f32[1], index: 0, kind: input, shape index: {}]
  %s1 = inlined_call_operand.vmem [shape: f32[1,2048], index: 1, kind: input, shape index: {}]
  %s2 = inlined_call_operand.vmem [shape: f32[1,2048], index: 2, kind: output, shape index: {}]
  %s3 = sld [smem:[#allocation0]]
  $region14: #{_expf_pallas.1} parent=0
    _
  %s5 = ssub.s32 1, %s3
  %s6 = scalar_select 0, %s5, %s3
  %7 = sst [smem:[#allocation3]] %s0
  // Predicated region
  $region2: #{_expf_pallas.1} parent=0 // pred_check
    _
  $region3: #{_expf_pallas.1} parent=0 // pred_check_branch
    %9 = sbr.rel (0) target = $region5
  $region4: #{_expf_pallas.1} parent=0 // pred_region
    _
  $region5: #{_expf_pallas.1} parent=0 // pred_fallthru
    _
  %v10 = vld [vmem:[%s1] sm:$0xff]
  %v11 = vld [vmem:[%s1 + $0x8] sm:$0xff]
  %s12 = sld [smem:[#allocation3]]
  %s13 = smul.f32 %s12, 0.5
  %v14 = vmul.f32 %v10, 0.5
  %v15 = vmul.f32 %v11, 0.5
  %v16 = vtanh.pop %v14
  %v17 = vtanh.pop %v15
  %v18 = vstv %s13
  %v19 = vmul.f32 %v18, %v16
  %v20 = vmul.f32 %v18, %v17
  %v21 = vmul.f32 %v19, 1.442695
  %v22 = vpow.pop %v21
  %v23 = vmul.f32 %v20, 1.442695
  %v24 = vpow.pop %v23
  %25 = vst [vmem:[%s2] sm:$0xff] %v22
  %26 = vst [vmem:[%s2 + $0x8] sm:$0xff] %v24
  // Predicated region
  $region6: #{_expf_pallas.1} parent=0 // pred_check
    _
  $region7: #{_expf_pallas.1} parent=0 // pred_check_branch
    %28 = sbr.rel (0) target = $region9
  $region8: #{_expf_pallas.1} parent=0 // pred_region
    _
  $region9: #{_expf_pallas.1} parent=0 // pred_fallthru
    _
  // Predicated region
  $region10: #{_expf_pallas.1} parent=0 // pred_check
    _
  $region11: #{_expf_pallas.1} parent=0 // pred_check_branch
    %30 = sbr.rel (0) target = $region13
  $region12: #{_expf_pallas.1} parent=0 // pred_region
    _
  $region13: #{_expf_pallas.1} parent=0 // pred_fallthru
    _

</llo_original>
